<compile_context>
chip_gen: v7x
topology: tpu7x:2x2x1
jax: 0.10.0
libtpu: 0.0.40
codegen_flags: <defaults>
</compile_context>

<pallas_src>
import functools

import jax
import jax.numpy as jnp
import numpy as np
from jax import lax
from jax.experimental import pallas as pl
from jax.experimental.pallas import tpu as pltpu

EPS = 1e-5


def _gemm_stats_kernel(xt_ref, w_ref, conv_ref, sum_ref, sq_ref):
    """Per (n, M'-tile): bf16 GEMM (f32 acc) + per-channel partial sum / sum-of-squares.

    xt_ref:   [Kp, TILE_M]     bf16 transposed im2col patches (zero padded)
    w_ref:    [Coutp, Kp]      bf16 flattened conv weight (zero padded)
    conv_ref: [Coutp, TILE_M]  f32 conv output tile (Cout on sublanes, M lane-dense)
    sum_ref:  [Coutp, 1]       f32 per-channel partial sum for this tile
    sq_ref:   [Coutp, 1]       f32 per-channel partial sum of squares for this tile
    """
    acc = jnp.dot(w_ref[...], xt_ref[...], preferred_element_type=jnp.float32)
    conv_ref[...] = acc
    sum_ref[...] = jnp.sum(acc, axis=-1, keepdims=True)          # XLU lane reduction
    sq_ref[...] = jnp.sum(acc * acc, axis=-1, keepdims=True)


def _bn_apply_kernel(conv_ref, scale_ref, shift_ref, o_ref):
    """Per (n, M'-tile) affine normalize: y = conv * scale + shift (per-channel, sublane bcast)."""
    o_ref[...] = (conv_ref[...] * scale_ref[...] + shift_ref[...]).astype(o_ref.dtype)


def _im2col_3d_t(x_ncdhw, kernel_size, stride, padding, dilation):
    """x: [N, Cin, D, H, W] -> transposed patches [N, K, M'] (bf16), K=(zd,zh,zw,ci), M'=Do*Ho*Wo."""
    # TODO(synk): patch extraction is still materialized in HBM by XLA (KD*KH*KW-fold
    #             activation expansion); an implicit-im2col tap loop with halo DMA inside
    #             the kernel would remove that traffic.
    n, cin, d, h, w = x_ncdhw.shape
    kd = kh = kw = kernel_size
    s, p, dil = stride, padding, dilation

    do = (d + 2 * p - dil * (kd - 1) - 1) // s + 1
    ho = (h + 2 * p - dil * (kh - 1) - 1) // s + 1
    wo = (w + 2 * p - dil * (kw - 1) - 1) // s + 1

    x = x_ncdhw.astype(jnp.bfloat16)
    x = jnp.pad(x, ((0, 0), (0, 0), (p, p), (p, p), (p, p)))

    slabs = []
    for zd in range(kd):
        for zh in range(kh):
            for zw in range(kw):
                slab = x[
                    :, :,
                    zd * dil : zd * dil + (do - 1) * s + 1 : s,
                    zh * dil : zh * dil + (ho - 1) * s + 1 : s,
                    zw * dil : zw * dil + (wo - 1) * s + 1 : s,
                ]                                          # [N, Cin, Do, Ho, Wo]
                slabs.append(slab)
    pt = jnp.stack(slabs, axis=1)                          # [N, KK, Cin, Do, Ho, Wo]
    k = kd * kh * kw * cin
    m1 = do * ho * wo
    return pt.reshape(n, k, m1), (do, ho, wo)


def _round_up(x, mult):
    return ((x + mult - 1) // mult) * mult


def _pick_tile_m(m, target):
    """Lane-dense (multiple of 128) M' tile; prefer >= 2 tiles so the 'parallel' grid
    can shard across both TensorCores on megacore parts (v7x)."""
    target = max(128, _round_up(target, 128))
    if m <= 128:
        return 128
    two_way = _round_up(pl.cdiv(m, 2), 128)
    return min(target, two_way)


@functools.partial(
    jax.jit,
    static_argnames=("kernel_size", "stride", "padding", "dilation", "tile_m", "out_dtype"),
)
def basic_conv3d(x, weight, gamma, beta, *, kernel_size, stride=1, padding=0,
                 dilation=1, tile_m=2048, out_dtype=jnp.float32):
    """Conv3d(bias=False) + BatchNorm3d(train-mode stats). x: [N,Cin,D,H,W] -> [N,Cout,Do,Ho,Wo]."""
    n = x.shape[0]
    cout, cin, kd, kh, kw = weight.shape

    patches_t, (do, ho, wo) = _im2col_3d_t(x, kernel_size, stride, padding, dilation)
    _, k, m1 = patches_t.shape                             # m1 = Do*Ho*Wo per sample

    kp = _round_up(k, 128)                                 # lane-dense LHS contraction dim
    coutp = _round_up(cout, 8)                             # Cout lives on f32 sublanes
    tm = _pick_tile_m(m1, tile_m)
    num_tiles = pl.cdiv(m1, tm)
    mp = num_tiles * tm

    # Zero padding contributes exact zeros to the dot and to the stat sums.
    patches_p = jnp.pad(patches_t, ((0, 0), (0, kp - k), (0, mp - m1)))
    # weight [Cout,Cin,KD,KH,KW] -> [Cout, KD,KH,KW,Cin] -> [Cout, K] -> padded [Coutp, Kp]
    w_flat = jnp.transpose(weight, (0, 2, 3, 4, 1)).reshape(cout, k)
    w_p = jnp.pad(w_flat.astype(jnp.bfloat16), ((0, coutp - cout), (0, kp - k)))

    cparams = pltpu.CompilerParams(
        dimension_semantics=("parallel", "parallel"),
        vmem_limit_bytes=32 * 1024 * 1024,                 # covers double-buffered working set on all gens
    )

    # ---- Pass 1: tiled GEMM (Cout on sublanes) + per-tile partial batch statistics ---------
    conv_t, part_sum, part_sq = pl.pallas_call(
        _gemm_stats_kernel,
        out_shape=(
            jax.ShapeDtypeStruct((n, coutp, mp), jnp.float32),
            jax.ShapeDtypeStruct((n, num_tiles, coutp, 1), jnp.float32),
            jax.ShapeDtypeStruct((n, num_tiles, coutp, 1), jnp.float32),
        ),
        grid=(n, num_tiles),
        in_specs=[
            pl.BlockSpec((None, kp, tm), lambda b, i: (b, 0, i)),
            pl.BlockSpec((coutp, kp), lambda b, i: (0, 0)),
        ],
        out_specs=(
            pl.BlockSpec((None, coutp, tm), lambda b, i: (b, 0, i)),
            pl.BlockSpec((None, None, coutp, 1), lambda b, i: (b, i, 0, 0)),
            pl.BlockSpec((None, None, coutp, 1), lambda b, i: (b, i, 0, 0)),
        ),
        compiler_params=cparams,
    )(patches_p, w_p)

    # ---- Finalize batch stats (tiny, per-channel) --------------------------------------------
    # Padded M' columns are exactly zero -> contribute 0 to both sums; divide by the true count.
    # Note: E[x^2]-E[x]^2 in f32 can cancel if |mean| >> std at very large M; acceptable here.
    count = n * m1
    total_sum = jnp.sum(part_sum[..., 0], axis=(0, 1))     # (Coutp,)
    total_sq = jnp.sum(part_sq[..., 0], axis=(0, 1))       # (Coutp,)
    mean = total_sum / count
    var = jnp.maximum(total_sq / count - mean * mean, 0.0)  # biased variance
    inv = lax.rsqrt(var + EPS)
    gamma_p = jnp.pad(gamma.astype(jnp.float32), (0, coutp - cout))
    beta_p = jnp.pad(beta.astype(jnp.float32), (0, coutp - cout))
    scale = (gamma_p * inv).reshape(coutp, 1)               # folded: y = conv*scale + shift
    shift = (beta_p - mean * gamma_p * inv).reshape(coutp, 1)

    # ---- Pass 2: tiled normalize/affine, output already in [N, Cout, M'] layout --------------
    out_t = pl.pallas_call(
        _bn_apply_kernel,
        out_shape=jax.ShapeDtypeStruct((n, coutp, mp), out_dtype),
        grid=(n, num_tiles),
        in_specs=[
            pl.BlockSpec((None, coutp, tm), lambda b, i: (b, 0, i)),
            pl.BlockSpec((coutp, 1), lambda b, i: (0, 0)),
            pl.BlockSpec((coutp, 1), lambda b, i: (0, 0)),
        ],
        out_specs=pl.BlockSpec((None, coutp, tm), lambda b, i: (b, 0, i)),
        compiler_params=cparams,
    )(conv_t, scale, shift)

    # No NCDHW transpose needed: [N, Cout, M'] reshapes directly to [N, Cout, Do, Ho, Wo].
    return out_t[:, :cout, :m1].reshape(n, cout, do, ho, wo)


def _reference(x, weight, gamma, beta, *, stride, padding, dilation):
    """Pure-JAX f32 reference: lax 3D conv + training-mode BatchNorm3d."""
    conv = lax.conv_general_dilated(
        x.astype(jnp.float32),
        weight.astype(jnp.float32),
        window_strides=(stride,) * 3,
        padding=[(padding, padding)] * 3,
        rhs_dilation=(dilation,) * 3,
        dimension_numbers=("NCDHW", "OIDHW", "NCDHW"),
        precision=lax.Precision.HIGHEST,
    )
    mean = jnp.mean(conv, axis=(0, 2, 3, 4), keepdims=True)
    var = jnp.mean((conv - mean) ** 2, axis=(0, 2, 3, 4), keepdims=True)
    g = gamma.reshape(1, -1, 1, 1, 1)
    b = beta.reshape(1, -1, 1, 1, 1)
    return (conv - mean) * lax.rsqrt(var + EPS) * g + b


if __name__ == "__main__":
    # Small deterministic problem: BasicConv3d(in_planes=4, out_planes=8, kernel_size=3, padding=1)
    N, CIN, COUT = 2, 4, 8
    D, H, W = 6, 12, 12
    KS, STRIDE, PAD, DIL = 3, 1, 1, 1

    key = jax.random.PRNGKey(0)
    kx, kw_, kg, kb = jax.random.split(key, 4)

    x = jax.random.normal(kx, (N, CIN, D, H, W), dtype=jnp.float32)
    # Conv3d weight (bias=False): [Cout, Cin, KD, KH, KW]
    fan_in = CIN * KS * KS * KS
    weight = jax.random.normal(kw_, (COUT, CIN, KS, KS, KS), dtype=jnp.float32) / np.sqrt(fan_in)
    # BatchNorm3d affine params (perturbed from default 1/0 so they matter)
    gamma = 1.0 + 0.1 * jax.random.normal(kg, (COUT,), dtype=jnp.float32)
    beta = 0.1 * jax.random.normal(kb, (COUT,), dtype=jnp.float32)

    out = basic_conv3d(
        x, weight, gamma, beta, kernel_size=KS, stride=STRIDE, padding=PAD, dilation=DIL
    )
    out = jax.block_until_ready(out)

    ref = _reference(x, weight, gamma, beta, stride=STRIDE, padding=PAD, dilation=DIL)
    assert out.shape == (N, COUT, D, H, W), out.shape
    # Tolerance relaxed vs a pure-f32 path: the MXU GEMM uses bf16 operands with f32
    # accumulation (intentional precision trade per perf guidance); error after BN
    # normalization is ~1e-2 worst case.
    np.testing.assert_allclose(np.asarray(out), np.asarray(ref), rtol=2e-2, atol=2e-2)

    print("KERNEL_OK")
</pallas_src>

<mosaic_0001>
module attributes {stable_mosaic.version = 11 : i64} {
  func.func @_gemm_stats_kernel(%arg0: i32, %arg1: i32, %arg2: memref<1x128x512xbf16, #tpu.memory_space<vmem>>, %arg3: memref<8x128xbf16, #tpu.memory_space<vmem>>, %arg4: memref<1x8x512xf32, #tpu.memory_space<vmem>>, %arg5: memref<1x1x8x1xf32, #tpu.memory_space<vmem>>, %arg6: memref<1x1x8x1xf32, #tpu.memory_space<vmem>>) attributes {dimension_semantics = [#tpu.dimension_semantics<parallel>, #tpu.dimension_semantics<parallel>], iteration_bounds = array<i64: 2, 2>, scalar_prefetch = 0 : i64, scratch_operands = 0 : i64, tpu.core_type = #tpu.core_type<tc>, window_params = [{transform_indices = @transform_0, window_bounds = array<i64: 1, 128, 512>}, {pipeline_mode = #tpu.pipeline_mode<synchronous>, transform_indices = @transform_1, window_bounds = array<i64: 8, 128>}, {transform_indices = @transform_2, window_bounds = array<i64: 1, 8, 512>}, {transform_indices = @transform_3, window_bounds = array<i64: 1, 1, 8, 1>}, {transform_indices = @transform_4, window_bounds = array<i64: 1, 1, 8, 1>}]} {
    %c0 = arith.constant 0 : index
    %c0_0 = arith.constant 0 : index
    %0 = vector.load %arg3[%c0, %c0_0] : memref<8x128xbf16, #tpu.memory_space<vmem>>, vector<8x128xbf16>
    %c0_1 = arith.constant 0 : index
    %c0_2 = arith.constant 0 : index
    %c0_3 = arith.constant 0 : index
    %1 = vector.load %arg2[%c0_1, %c0_2, %c0_3] : memref<1x128x512xbf16, #tpu.memory_space<vmem>>, vector<1x128x512xbf16>
    %2 = vector.shape_cast %1 : vector<1x128x512xbf16> to vector<128x512xbf16>
    %cst = arith.constant dense<0.000000e+00> : vector<8x512xf32>
    %3 = tpu.matmul %0, %2, %cst {dimension_numbers = #tpu.dot_dimension_numbers<[1], [0], [0], [1], [0, 0, 1, 1], [], []>} : vector<8x128xbf16>, vector<128x512xbf16>, vector<8x512xf32> -> vector<8x512xf32>
    %c0_4 = arith.constant 0 : index
    %c0_5 = arith.constant 0 : index
    %c0_6 = arith.constant 0 : index
    %4 = vector.load %arg4[%c0_4, %c0_5, %c0_6] : memref<1x8x512xf32, #tpu.memory_space<vmem>>, vector<1x8x512xf32>
    %5 = vector.shape_cast %4 : vector<1x8x512xf32> to vector<8x512xf32>
    %6 = vector.shape_cast %3 : vector<8x512xf32> to vector<1x8x512xf32>
    tpu.vector_store %arg4[%c0_4, %c0_5, %c0_6], %6 {strides = array<i32>} : memref<1x8x512xf32, #tpu.memory_space<vmem>>, vector<1x8x512xf32>,
    %cst_7 = arith.constant dense<0.000000e+00> : vector<8xf32>
    %7 = vector.multi_reduction <add>, %3, %cst_7 [1] : vector<8x512xf32> to vector<8xf32>
    %8 = vector.shape_cast %7 : vector<8xf32> to vector<8x1xf32>
    %c0_8 = arith.constant 0 : index
    %c0_9 = arith.constant 0 : index
    %c0_10 = arith.constant 0 : index
    %c0_11 = arith.constant 0 : index
    %9 = vector.load %arg5[%c0_8, %c0_9, %c0_10, %c0_11] : memref<1x1x8x1xf32, #tpu.memory_space<vmem>>, vector<1x1x8x1xf32>
    %10 = vector.shape_cast %9 : vector<1x1x8x1xf32> to vector<8x1xf32>
    %11 = vector.shape_cast %8 : vector<8x1xf32> to vector<1x1x8x1xf32>
    tpu.vector_store %arg5[%c0_8, %c0_9, %c0_10, %c0_11], %11 {strides = array<i32>} : memref<1x1x8x1xf32, #tpu.memory_space<vmem>>, vector<1x1x8x1xf32>,
    %12 = arith.mulf %3, %3 : vector<8x512xf32>
    %cst_12 = arith.constant dense<0.000000e+00> : vector<8xf32>
    %13 = vector.multi_reduction <add>, %12, %cst_12 [1] : vector<8x512xf32> to vector<8xf32>
    %14 = vector.shape_cast %13 : vector<8xf32> to vector<8x1xf32>
    %c0_13 = arith.constant 0 : index
    %c0_14 = arith.constant 0 : index
    %c0_15 = arith.constant 0 : index
    %c0_16 = arith.constant 0 : index
    %15 = vector.load %arg6[%c0_13, %c0_14, %c0_15, %c0_16] : memref<1x1x8x1xf32, #tpu.memory_space<vmem>>, vector<1x1x8x1xf32>
    %16 = vector.shape_cast %15 : vector<1x1x8x1xf32> to vector<8x1xf32>
    %17 = vector.shape_cast %14 : vector<8x1xf32> to vector<1x1x8x1xf32>
    tpu.vector_store %arg6[%c0_13, %c0_14, %c0_15, %c0_16], %17 {strides = array<i32>} : memref<1x1x8x1xf32, #tpu.memory_space<vmem>>, vector<1x1x8x1xf32>,
    return
  }
  func.func @transform_0(%arg0: i32, %arg1: i32) -> (i32, i32, i32) {
    %c0_i32 = arith.constant 0 : i32
    %c0_i32_0 = arith.constant 0 : i32
    return %arg0, %c0_i32, %arg1 : i32, i32, i32
  }
  func.func @transform_1(%arg0: i32, %arg1: i32) -> (i32, i32) {
    %c0_i32 = arith.constant 0 : i32
    %c0_i32_0 = arith.constant 0 : i32
    %c0_i32_1 = arith.constant 0 : i32
    return %c0_i32, %c0_i32_0 : i32, i32
  }
  func.func @transform_2(%arg0: i32, %arg1: i32) -> (i32, i32, i32) {
    %c0_i32 = arith.constant 0 : i32
    %c0_i32_0 = arith.constant 0 : i32
    return %arg0, %c0_i32, %arg1 : i32, i32, i32
  }
  func.func @transform_3(%arg0: i32, %arg1: i32) -> (i32, i32, i32, i32) {
    %c0_i32 = arith.constant 0 : i32
    %c0_i32_0 = arith.constant 0 : i32
    %c0_i32_1 = arith.constant 0 : i32
    return %arg0, %arg1, %c0_i32, %c0_i32_0 : i32, i32, i32, i32
  }
  func.func @transform_4(%arg0: i32, %arg1: i32) -> (i32, i32, i32, i32) {
    %c0_i32 = arith.constant 0 : i32
    %c0_i32_0 = arith.constant 0 : i32
    %c0_i32_1 = arith.constant 0 : i32
    return %arg0, %arg1, %c0_i32, %c0_i32_0 : i32, i32, i32, i32
  }
}

module attributes {stable_mosaic.version = 11 : i64} {
  func.func @_bn_apply_kernel(%arg0: i32, %arg1: i32, %arg2: memref<1x8x512xf32, #tpu.memory_space<vmem>>, %arg3: memref<8x1xf32, #tpu.memory_space<vmem>>, %arg4: memref<8x1xf32, #tpu.memory_space<vmem>>, %arg5: memref<1x8x512xf32, #tpu.memory_space<vmem>>) attributes {dimension_semantics = [#tpu.dimension_semantics<parallel>, #tpu.dimension_semantics<parallel>], iteration_bounds = array<i64: 2, 2>, scalar_prefetch = 0 : i64, scratch_operands = 0 : i64, tpu.core_type = #tpu.core_type<tc>, window_params = [{transform_indices = @transform_0, window_bounds = array<i64: 1, 8, 512>}, {pipeline_mode = #tpu.pipeline_mode<synchronous>, transform_indices = @transform_1, window_bounds = array<i64: 8, 1>}, {pipeline_mode = #tpu.pipeline_mode<synchronous>, transform_indices = @transform_2, window_bounds = array<i64: 8, 1>}, {transform_indices = @transform_3, window_bounds = array<i64: 1, 8, 512>}]} {
    %c0 = arith.constant 0 : index
    %c0_0 = arith.constant 0 : index
    %c0_1 = arith.constant 0 : index
    %0 = vector.load %arg2[%c0, %c0_0, %c0_1] : memref<1x8x512xf32, #tpu.memory_space<vmem>>, vector<1x8x512xf32>
    %1 = vector.shape_cast %0 : vector<1x8x512xf32> to vector<8x512xf32>
    %c0_2 = arith.constant 0 : index
    %c0_3 = arith.constant 0 : index
    %2 = vector.load %arg3[%c0_2, %c0_3] : memref<8x1xf32, #tpu.memory_space<vmem>>, vector<8x1xf32>
    %3 = vector.broadcast %2 : vector<8x1xf32> to vector<8x512xf32>
    %4 = arith.mulf %1, %3 : vector<8x512xf32>
    %c0_4 = arith.constant 0 : index
    %c0_5 = arith.constant 0 : index
    %5 = vector.load %arg4[%c0_4, %c0_5] : memref<8x1xf32, #tpu.memory_space<vmem>>, vector<8x1xf32>
    %6 = vector.broadcast %5 : vector<8x1xf32> to vector<8x512xf32>
    %7 = arith.addf %4, %6 : vector<8x512xf32>
    %c0_6 = arith.constant 0 : index
    %c0_7 = arith.constant 0 : index
    %c0_8 = arith.constant 0 : index
    %8 = vector.load %arg5[%c0_6, %c0_7, %c0_8] : memref<1x8x512xf32, #tpu.memory_space<vmem>>, vector<1x8x512xf32>
    %9 = vector.shape_cast %8 : vector<1x8x512xf32> to vector<8x512xf32>
    %10 = vector.shape_cast %7 : vector<8x512xf32> to vector<1x8x512xf32>
    tpu.vector_store %arg5[%c0_6, %c0_7, %c0_8], %10 {strides = array<i32>} : memref<1x8x512xf32, #tpu.memory_space<vmem>>, vector<1x8x512xf32>,
    return
  }
  func.func @transform_0(%arg0: i32, %arg1: i32) -> (i32, i32, i32) {
    %c0_i32 = arith.constant 0 : i32
    %c0_i32_0 = arith.constant 0 : i32
    return %arg0, %c0_i32, %arg1 : i32, i32, i32
  }
  func.func @transform_1(%arg0: i32, %arg1: i32) -> (i32, i32) {
    %c0_i32 = arith.constant 0 : i32
    %c0_i32_0 = arith.constant 0 : i32
    %c0_i32_1 = arith.constant 0 : i32
    return %c0_i32, %c0_i32_0 : i32, i32
  }
  func.func @transform_2(%arg0: i32, %arg1: i32) -> (i32, i32) {
    %c0_i32 = arith.constant 0 : i32
    %c0_i32_0 = arith.constant 0 : i32
    %c0_i32_1 = arith.constant 0 : i32
    return %c0_i32, %c0_i32_0 : i32, i32
  }
  func.func @transform_3(%arg0: i32, %arg1: i32) -> (i32, i32, i32) {
    %c0_i32 = arith.constant 0 : i32
    %c0_i32_0 = arith.constant 0 : i32
    return %arg0, %c0_i32, %arg1 : i32, i32, i32
  }
}

</mosaic_0001>

<llo_original>
// kernel: basic_conv3d.3
$region0: #{basic_conv3d.3}
  #allocation0 [shape = 'u32[]', space=smem, size = 0x4, offset = 0x4, fixed_abs, tag = 'smem constant byte address 0x4 - core index']
  #allocation1 [shape = 'u32[144,128]{1,0:T(1,128)}', space=vmem, size = 0x12000, scoped, tag = 'internal scratch']
  %s0 = inlined_call_operand.vmem [shape: f32[2,8,1024], index: 0, kind: input, shape index: {}]
  %s1 = inlined_call_operand.vmem [shape: f32[8,1], index: 1, kind: input, shape index: {}]
  %s2 = inlined_call_operand.vmem [shape: f32[8,1], index: 2, kind: input, shape index: {}]
  %s3 = inlined_call_operand.vmem [shape: f32[2,8,1024], index: 3, kind: output, shape index: {}]
  %s4 = sld [smem:[#allocation0]]
  $region45: #{basic_conv3d.3} parent=0
    _
  %s6 = ssub.s32 1, %s4
  %s7 = scalar_select 0, %s6, %s4
  loop: start=0, step=1, limit=6
  $region2: #{basic_conv3d.3} parent=0 // loop_pre_header
    _
  $region3: #{basic_conv3d.3} parent=0 // loop_header
    %s9 = sphi 0, %s13
    %p10 = scmp.ge.s32.totalorder %s9, 6
    %s16 = sphi 0, %s28
    %s17 = sphi 0, %s24
    %s18 = sphi 0, %s16
    %s19 = sphi 0, %s17
    %s20 = sphi 0, %s18
    %s21 = sphi 0, %s19
    %s33 = sphi 0, %s35
    %s36 = sphi 0, %s33
    %s37 = sphi 0, %s36
    %s53 = sphi 0, %s37
    %s57 = sphi 0, %s57
    %s59 = sphi 0, %s57
    %s60 = sphi 0, %s59
    %s74 = sphi 0, %s60
    %s78 = sphi 0, %s78
    %s80 = sphi 0, %s78
    %s81 = sphi 0, %s80
    %s95 = sphi 0, %s81
    %s103 = sphi 0, %s105
    %s106 = sphi 0, %s103
    %s107 = sphi 0, %s106
    %s123 = sphi 0, %s107
  $region4: #{basic_conv3d.3} parent=0 // loop_header_branch
    %12 = sbr.rel (%p10) target = $region8
  $region5: #{basic_conv3d.3} parent=0 // loop_body
    %s14 = ssub.s32 %s9, 1
    %s15 = ssub.s32 %s9, 2
    %s22 = sadd.s32 1, %s17
    %p23 = scmp.ge.s32.totalorder %s22, 2
    %s24 = scalar_select %p23, 0, %s22
    %s25 = sadd.s32 1, %s16
    %s26 = scalar_select %p23, %s25, %s16
    %p27 = scmp.ge.s32.totalorder %s26, 2
    %s28 = scalar_select %p27, 0, %s26
    %s29 = ssub.s32 %s16, %s28
    %s30 = ssub.s32 %s17, %s24
    %s31 = sor.u32 %s29, %s30
    %p32 = scmp.eq.s32.totalorder %s31, 0
    %s34 = sadd.s32 %s33, 1
    %s35 = scalar_select %p32, %s33, %s34
    %p38 = pneg %p32
    %p39 = scmp.eq.s32.totalorder %s9, 3
    %p40 = por %p38, %p39
    %p41 = scmp.ne.s32.totalorder %s33, %s36
    %p42 = scmp.eq.s32.totalorder %s9, 0
    %p43 = por %p41, %p42
    %p44 = scmp.ne.s32.totalorder %s33, %s36
    %p45 = scmp.eq.s32.totalorder %s14, 3
    %p46 = por %p44, %p45
    %p47 = scmp.ne.s32.totalorder %s36, %s37
    %p48 = scmp.eq.s32.totalorder %s14, 0
    %p49 = por %p47, %p48
    %p50 = scmp.ne.s32.totalorder %s36, %s37
    %p51 = scmp.eq.s32.totalorder %s15, 3
    %p52 = por %p50, %p51
    %p54 = scmp.ne.s32.totalorder %s37, %s53
    %p55 = scmp.eq.s32.totalorder %s15, 0
    %p56 = por %p54, %p55
    %s58 = sadd.s32 %s57, 1
    %p61 = scmp.eq.s32.totalorder %s9, 3
    %p62 = scmp.ne.s32.totalorder %s57, %s59
    %p63 = scmp.eq.s32.totalorder %s9, 0
    %p64 = por %p62, %p63
    %p65 = scmp.ne.s32.totalorder %s57, %s59
    %p66 = scmp.eq.s32.totalorder %s14, 3
    %p67 = por %p65, %p66
    %p68 = scmp.ne.s32.totalorder %s59, %s60
    %p69 = scmp.eq.s32.totalorder %s14, 0
    %p70 = por %p68, %p69
    %p71 = scmp.ne.s32.totalorder %s59, %s60
    %p72 = scmp.eq.s32.totalorder %s15, 3
    %p73 = por %p71, %p72
    %p75 = scmp.ne.s32.totalorder %s60, %s74
    %p76 = scmp.eq.s32.totalorder %s15, 0
    %p77 = por %p75, %p76
    %s79 = sadd.s32 %s78, 1
    %p82 = scmp.eq.s32.totalorder %s9, 3
    %p83 = scmp.ne.s32.totalorder %s78, %s80
    %p84 = scmp.eq.s32.totalorder %s9, 0
    %p85 = por %p83, %p84
    %p86 = scmp.ne.s32.totalorder %s78, %s80
    %p87 = scmp.eq.s32.totalorder %s14, 3
    %p88 = por %p86, %p87
    %p89 = scmp.ne.s32.totalorder %s80, %s81
    %p90 = scmp.eq.s32.totalorder %s14, 0
    %p91 = por %p89, %p90
    %p92 = scmp.ne.s32.totalorder %s80, %s81
    %p93 = scmp.eq.s32.totalorder %s15, 3
    %p94 = por %p92, %p93
    %p96 = scmp.ne.s32.totalorder %s81, %s95
    %p97 = scmp.eq.s32.totalorder %s15, 0
    %p98 = por %p96, %p97
    %s99 = ssub.s32 %s16, %s28
    %s100 = ssub.s32 %s17, %s24
    %s101 = sor.u32 %s99, %s100
    %p102 = scmp.eq.s32.totalorder %s101, 0
    %s104 = sadd.s32 %s103, 1
    %s105 = scalar_select %p102, %s103, %s104
    %p108 = pneg %p102
    %p109 = scmp.eq.s32.totalorder %s9, 3
    %p110 = por %p108, %p109
    %p111 = scmp.ne.s32.totalorder %s103, %s106
    %p112 = scmp.eq.s32.totalorder %s9, 0
    %p113 = por %p111, %p112
    %p114 = scmp.ne.s32.totalorder %s103, %s106
    %p115 = scmp.eq.s32.totalorder %s14, 3
    %p116 = por %p114, %p115
    %p117 = scmp.ne.s32.totalorder %s106, %s107
    %p118 = scmp.eq.s32.totalorder %s14, 0
    %p119 = por %p117, %p118
    %p120 = scmp.ne.s32.totalorder %s106, %s107
    %p121 = scmp.eq.s32.totalorder %s15, 3
    %p122 = por %p120, %p121
    %p124 = scmp.ne.s32.totalorder %s107, %s123
    %p125 = scmp.eq.s32.totalorder %s15, 0
    %p126 = por %p124, %p125
    %p127 = scmp.le.s32.totalorder 1, %s9
    %p128 = scmp.lt.s32.totalorder %s9, 5
    %p129 = pnand %p127, %p128
    %p130 = pneg %p129
    // Predicated region
    $region9: #{basic_conv3d.3} parent=5 // pred_check
      _
    $region10: #{basic_conv3d.3} parent=5 // pred_check_branch
      %132 = sbr.rel (%p129) target = $region12
    $region11: #{basic_conv3d.3} parent=5 // pred_region
      %s133 = ssub.s32 %s9, 1
      // Predicated region
      $region13: #{basic_conv3d.3} parent=11 // pred_check
        %p134 = pneg %p70
      $region14: #{basic_conv3d.3} parent=11 // pred_check_branch
        %136 = sbr.rel (%p134) target = $region16
      $region15: #{basic_conv3d.3} parent=11 // pred_region
        _
      $region16: #{basic_conv3d.3} parent=11 // pred_fallthru
        _
      // Predicated region
      $region17: #{basic_conv3d.3} parent=11 // pred_check
        %p137 = pneg %p91
      $region18: #{basic_conv3d.3} parent=11 // pred_check_branch
        %139 = sbr.rel (%p137) target = $region20
      $region19: #{basic_conv3d.3} parent=11 // pred_region
        _
      $region20: #{basic_conv3d.3} parent=11 // pred_fallthru
        _
    $region12: #{basic_conv3d.3} parent=5 // pred_fallthru
      _
    %p140 = scmp.lt.s32.totalorder %s9, 4
    // Predicated region
    $region21: #{basic_conv3d.3} parent=5 // pred_check
      %p141 = pneg %p140
    $region22: #{basic_conv3d.3} parent=5 // pred_check_branch
      %143 = sbr.rel (%p141) target = $region24
    $region23: #{basic_conv3d.3} parent=5 // pred_region
      // Predicated region
      $region25: #{basic_conv3d.3} parent=23 // pred_check
        %p144 = pneg %p43
      $region26: #{basic_conv3d.3} parent=23 // pred_check_branch
        %146 = sbr.rel (%p144) target = $region28
      $region27: #{basic_conv3d.3} parent=23 // pred_region
        %s147 = smul.u32 4, %s17
        %p148 = scmp.lt.s32.totalorder %s16, 1
        %s149 = scalar_select %p148, %s16, 1
        %p150 = scmp.lt.s32.totalorder %s147, 7
        %s151 = scalar_select %p150, %s147, 7
        %s152 = smul.addr %s149, 8
        %s153 = sadd.s32 %s151, %s152
        %s154 = smul.addr %s153, 8
        %s155 = scalar_lea.vmem %s0, %s154
        %s156 = smul.u32 4, %s17
      $region28: #{basic_conv3d.3} parent=23 // pred_fallthru
        _
    $region24: #{basic_conv3d.3} parent=5 // pred_fallthru
      _
    %p157 = scmp.le.s32.totalorder 1, %s9
    %p158 = scmp.lt.s32.totalorder %s9, 5
    %p159 = pnand %p157, %p158
    %p160 = pneg %p159
    // Predicated region
    $region29: #{basic_conv3d.3} parent=5 // pred_check
      _
    $region30: #{basic_conv3d.3} parent=5 // pred_check_branch
      %162 = sbr.rel (%p159) target = $region32
    $region31: #{basic_conv3d.3} parent=5 // pred_region
      %s163 = ssub.s32 %s9, 1
      %s164 = smul.u32 4, %s19
      %p165 = scmp.lt.s32.totalorder %s18, 1
      %s166 = scalar_select %p165, %s18, 1
      %p167 = scmp.lt.s32.totalorder %s164, 7
      %s168 = scalar_select %p167, %s164, 7
      %s169 = smul.addr %s166, 8
      %s170 = sadd.s32 %s168, %s169
      %s171 = smul.addr %s170, 8
      %s172 = scalar_lea.vmem %s0, %s171
      %p173 = pneg %p49
      %p174 = pneg %p46
      %p175 = pneg %p70
      %p176 = pneg %p67
      %p177 = pneg %p91
      %p178 = pneg %p88
      %p179 = pneg %p119
      %p180 = pneg %p116
      %s181 = smul.u32 4, %s19
      %p182 = scmp.lt.s32.totalorder %s18, 1
      %s183 = scalar_select %p182, %s18, 1
      %p184 = scmp.lt.s32.totalorder %s181, 7
      %s185 = scalar_select %p184, %s181, 7
      %s186 = smul.addr %s183, 8
      %s187 = sadd.s32 %s185, %s186
      %s188 = smul.addr %s187, 8
      %s189 = scalar_lea.vmem %s3, %s188
      %s190 = smul.u32 4, %s19
      %p191 = scmp.lt.s32.totalorder %s18, 1
      %s192 = scalar_select %p191, %s18, 1
      %p193 = scmp.lt.s32.totalorder %s190, 7
      %s194 = scalar_select %p193, %s190, 7
      %s195 = smul.addr %s192, 8
      %s196 = sadd.s32 %s194, %s195
      %s197 = smul.addr %s196, 8
      %s198 = scalar_lea.vmem %s0, %s197
      %s199 = smul.u32 4, %s19
      %s200 = smul.u32 4, %s19
      %p201 = scmp.lt.s32.totalorder %s18, 1
      %s202 = scalar_select %p201, %s18, 1
      %p203 = scmp.lt.s32.totalorder %s200, 7
      %s204 = scalar_select %p203, %s200, 7
      %s205 = smul.addr %s202, 8
      %s206 = sadd.s32 %s204, %s205
      %s207 = smul.addr %s206, 8
      %s208 = scalar_lea.vmem %s3, %s207
      %s209 = smul.u32 4, %s19
      %v210 = vld [vmem:[%s198] sm:$0xff]
      %v211 = vld [vmem:[%s198 + $0x8] sm:$0xff]
      %v212 = vld [vmem:[%s198 + $0x10] sm:$0xff]
      %v213 = vld [vmem:[%s198 + $0x18] sm:$0xff]
      %v214 = vld [vmem:[%s1] sm:$0xff]
      %216 = vset.pattern.permute.xlu0 0
      %217 = vperm.xlu0 %216, %v214
      %v218 = vpop.permute.xlu0 %217
      %v220 = vmul.f32 %v210, %v218
      %v221 = vmul.f32 %v211, %v218
      %v222 = vmul.f32 %v212, %v218
      %v223 = vmul.f32 %v213, %v218
      %v224 = vld [vmem:[%s2] sm:$0xff]
      %226 = vset.pattern.permute.xlu0 0
      %227 = vperm.xlu0 %226, %v224
      %v228 = vpop.permute.xlu0 %227
      %v230 = vadd.f32 %v220, %v228
      %v231 = vadd.f32 %v221, %v228
      %v232 = vadd.f32 %v222, %v228
      %v233 = vadd.f32 %v223, %v228
      %234 = vst [vmem:[%s208] sm:$0xff] %v230
      %235 = vst [vmem:[%s208 + $0x8] sm:$0xff] %v231
      %236 = vst [vmem:[%s208 + $0x10] sm:$0xff] %v232
      %237 = vst [vmem:[%s208 + $0x18] sm:$0xff] %v233
      %s238 = smul.u32 4, %s19
      %p239 = scmp.lt.s32.totalorder %s18, 1
      %s240 = scalar_select %p239, %s18, 1
      %p241 = scmp.lt.s32.totalorder %s238, 7
      %s242 = scalar_select %p241, %s238, 7
      %s243 = smul.addr %s240, 8
      %s244 = sadd.s32 %s242, %s243
      %s245 = smul.addr %s244, 8
      %s246 = scalar_lea.vmem %s3, %s245
      // Predicated region
      $region33: #{basic_conv3d.3} parent=31 // pred_check
        %p247 = pneg %p116
      $region34: #{basic_conv3d.3} parent=31 // pred_check_branch
        %249 = sbr.rel (%p247) target = $region36
      $region35: #{basic_conv3d.3} parent=31 // pred_region
        %s250 = smul.u32 4, %s19
      $region36: #{basic_conv3d.3} parent=31 // pred_fallthru
        _
    $region32: #{basic_conv3d.3} parent=5 // pred_fallthru
      _
    %p251 = scmp.le.s32.totalorder 2, %s9
    // Predicated region
    $region37: #{basic_conv3d.3} parent=5 // pred_check
      %p252 = pneg %p251
    $region38: #{basic_conv3d.3} parent=5 // pred_check_branch
      %254 = sbr.rel (%p252) target = $region40
    $region39: #{basic_conv3d.3} parent=5 // pred_region
      %s255 = ssub.s32 %s9, 2
      // Predicated region
      $region41: #{basic_conv3d.3} parent=39 // pred_check
        %p256 = pneg %p122
      $region42: #{basic_conv3d.3} parent=39 // pred_check_branch
        %258 = sbr.rel (%p256) target = $region44
      $region43: #{basic_conv3d.3} parent=39 // pred_region
        %s259 = smul.u32 4, %s21
        %p260 = scmp.lt.s32.totalorder %s20, 1
        %s261 = scalar_select %p260, %s20, 1
        %p262 = scmp.lt.s32.totalorder %s259, 7
        %s263 = scalar_select %p262, %s259, 7
        %s264 = smul.addr %s261, 8
        %s265 = sadd.s32 %s263, %s264
        %s266 = smul.addr %s265, 8
        %s267 = scalar_lea.vmem %s3, %s266
      $region44: #{basic_conv3d.3} parent=39 // pred_fallthru
        _
    $region40: #{basic_conv3d.3} parent=5 // pred_fallthru
      _
  $region6: #{basic_conv3d.3} parent=0 // loop_footer
    %s13 = sadd.s32 1, %s9
  $region7: #{basic_conv3d.3} parent=0 // loop_footer_branch
    %8 = sbr.rel target = $region3
  $region8: #{basic_conv3d.3} parent=0 // loop_exit
    _

// kernel: basic_conv3d.2
$region0: #{basic_conv3d.2}
  #allocation0 [shape = 'u32[]', space=smem, size = 0x4, offset = 0x4, fixed_abs, tag = 'smem constant byte address 0x4 - core index']
  #allocation1 [shape = 'u32[144,128]{1,0:T(1,128)}', space=vmem, size = 0x12000, scoped, tag = 'internal scratch']
  %s0 = inlined_call_operand.vmem [shape: bf16[2,128,1024], index: 0, kind: input, shape index: {}]
  %s1 = inlined_call_operand.vmem [shape: bf16[8,128], index: 1, kind: input, shape index: {}]
  %s2 = inlined_call_operand.vmem [shape: f32[2,8,1024], index: 2, kind: output, shape index: {0}]
  %s3 = inlined_call_operand.vmem [shape: f32[2,2,8,1], index: 3, kind: output, shape index: {1}]
  %s4 = inlined_call_operand.vmem [shape: f32[2,2,8,1], index: 4, kind: output, shape index: {2}]
  %5 = xla_tuple %s2, %s3, %s4
  %s6 = sld [smem:[#allocation0]]
  $region80: #{basic_conv3d.2} parent=0
    _
  %s8 = ssub.s32 1, %s6
  %s9 = scalar_select 0, %s8, %s6
  $region1: #{basic_conv3d.2} parent=0
    #allocation2 [shape = 'u8[262144]{0}', space=vmem, size = 0x40000, scoped, tag = 'input window, operand 0']
    loop: start=0, step=1, limit=6
    $region2: #{basic_conv3d.2} parent=1 // loop_pre_header
      _
    $region3: #{basic_conv3d.2} parent=1 // loop_header
      %s11 = sphi 0, %s15
      %p12 = scmp.ge.s32.totalorder %s11, 6
      %s18 = sphi 0, %s30
      %s19 = sphi 0, %s26
      %s20 = sphi 0, %s18
      %s21 = sphi 0, %s19
      %s22 = sphi 0, %s20
      %s23 = sphi 0, %s21
      %s35 = sphi 0, %s37
      %s38 = sphi 0, %s35
      %s39 = sphi 0, %s38
      %s55 = sphi 0, %s39
      %s59 = sphi 0, %s59
      %s61 = sphi 0, %s59
      %s62 = sphi 0, %s61
      %s76 = sphi 0, %s62
      %s84 = sphi 0, %s86
      %s87 = sphi 0, %s84
      %s88 = sphi 0, %s87
      %s104 = sphi 0, %s88
      %s112 = sphi 0, %s114
      %s115 = sphi 0, %s112
      %s116 = sphi 0, %s115
      %s132 = sphi 0, %s116
      %s140 = sphi 0, %s142
      %s143 = sphi 0, %s140
      %s144 = sphi 0, %s143
      %s160 = sphi 0, %s144
    $region4: #{basic_conv3d.2} parent=1 // loop_header_branch
      %14 = sbr.rel (%p12) target = $region8
    $region5: #{basic_conv3d.2} parent=1 // loop_body
      %s16 = ssub.s32 %s11, 1
      %s17 = ssub.s32 %s11, 2
      %s24 = sadd.s32 1, %s19
      %p25 = scmp.ge.s32.totalorder %s24, 2
      %s26 = scalar_select %p25, 0, %s24
      %s27 = sadd.s32 1, %s18
      %s28 = scalar_select %p25, %s27, %s18
      %p29 = scmp.ge.s32.totalorder %s28, 2
      %s30 = scalar_select %p29, 0, %s28
      %s31 = ssub.s32 %s18, %s30
      %s32 = ssub.s32 %s19, %s26
      %s33 = sor.u32 %s31, %s32
      %p34 = scmp.eq.s32.totalorder %s33, 0
      %s36 = sadd.s32 %s35, 1
      %s37 = scalar_select %p34, %s35, %s36
      %p40 = pneg %p34
      %p41 = scmp.eq.s32.totalorder %s11, 3
      %p42 = por %p40, %p41
      %p43 = scmp.ne.s32.totalorder %s35, %s38
      %p44 = scmp.eq.s32.totalorder %s11, 0
      %p45 = por %p43, %p44
      %p46 = scmp.ne.s32.totalorder %s35, %s38
      %p47 = scmp.eq.s32.totalorder %s16, 3
      %p48 = por %p46, %p47
      %p49 = scmp.ne.s32.totalorder %s38, %s39
      %p50 = scmp.eq.s32.totalorder %s16, 0
      %p51 = por %p49, %p50
      %p52 = scmp.ne.s32.totalorder %s38, %s39
      %p53 = scmp.eq.s32.totalorder %s17, 3
      %p54 = por %p52, %p53
      %p56 = scmp.ne.s32.totalorder %s39, %s55
      %p57 = scmp.eq.s32.totalorder %s17, 0
      %p58 = por %p56, %p57
      %s60 = sadd.s32 %s59, 1
      %p63 = scmp.eq.s32.totalorder %s11, 3
      %p64 = scmp.ne.s32.totalorder %s59, %s61
      %p65 = scmp.eq.s32.totalorder %s11, 0
      %p66 = por %p64, %p65
      %p67 = scmp.ne.s32.totalorder %s59, %s61
      %p68 = scmp.eq.s32.totalorder %s16, 3
      %p69 = por %p67, %p68
      %p70 = scmp.ne.s32.totalorder %s61, %s62
      %p71 = scmp.eq.s32.totalorder %s16, 0
      %p72 = por %p70, %p71
      %p73 = scmp.ne.s32.totalorder %s61, %s62
      %p74 = scmp.eq.s32.totalorder %s17, 3
      %p75 = por %p73, %p74
      %p77 = scmp.ne.s32.totalorder %s62, %s76
      %p78 = scmp.eq.s32.totalorder %s17, 0
      %p79 = por %p77, %p78
      %s80 = ssub.s32 %s18, %s30
      %s81 = ssub.s32 %s19, %s26
      %s82 = sor.u32 %s80, %s81
      %p83 = scmp.eq.s32.totalorder %s82, 0
      %s85 = sadd.s32 %s84, 1
      %s86 = scalar_select %p83, %s84, %s85
      %p89 = pneg %p83
      %p90 = scmp.eq.s32.totalorder %s11, 3
      %p91 = por %p89, %p90
      %p92 = scmp.ne.s32.totalorder %s84, %s87
      %p93 = scmp.eq.s32.totalorder %s11, 0
      %p94 = por %p92, %p93
      %p95 = scmp.ne.s32.totalorder %s84, %s87
      %p96 = scmp.eq.s32.totalorder %s16, 3
      %p97 = por %p95, %p96
      %p98 = scmp.ne.s32.totalorder %s87, %s88
      %p99 = scmp.eq.s32.totalorder %s16, 0
      %p100 = por %p98, %p99
      %p101 = scmp.ne.s32.totalorder %s87, %s88
      %p102 = scmp.eq.s32.totalorder %s17, 3
      %p103 = por %p101, %p102
      %p105 = scmp.ne.s32.totalorder %s88, %s104
      %p106 = scmp.eq.s32.totalorder %s17, 0
      %p107 = por %p105, %p106
      %s108 = ssub.s32 %s18, %s30
      %s109 = ssub.s32 %s19, %s26
      %s110 = sor.u32 %s108, %s109
      %p111 = scmp.eq.s32.totalorder %s110, 0
      %s113 = sadd.s32 %s112, 1
      %s114 = scalar_select %p111, %s112, %s113
      %p117 = pneg %p111
      %p118 = scmp.eq.s32.totalorder %s11, 3
      %p119 = por %p117, %p118
      %p120 = scmp.ne.s32.totalorder %s112, %s115
      %p121 = scmp.eq.s32.totalorder %s11, 0
      %p122 = por %p120, %p121
      %p123 = scmp.ne.s32.totalorder %s112, %s115
      %p124 = scmp.eq.s32.totalorder %s16, 3
      %p125 = por %p123, %p124
      %p126 = scmp.ne.s32.totalorder %s115, %s116
      %p127 = scmp.eq.s32.totalorder %s16, 0
      %p128 = por %p126, %p127
      %p129 = scmp.ne.s32.totalorder %s115, %s116
      %p130 = scmp.eq.s32.totalorder %s17, 3
      %p131 = por %p129, %p130
      %p133 = scmp.ne.s32.totalorder %s116, %s132
      %p134 = scmp.eq.s32.totalorder %s17, 0
      %p135 = por %p133, %p134
      %s136 = ssub.s32 %s18, %s30
      %s137 = ssub.s32 %s19, %s26
      %s138 = sor.u32 %s136, %s137
      %p139 = scmp.eq.s32.totalorder %s138, 0
      %s141 = sadd.s32 %s140, 1
      %s142 = scalar_select %p139, %s140, %s141
      %p145 = pneg %p139
      %p146 = scmp.eq.s32.totalorder %s11, 3
      %p147 = por %p145, %p146
      %p148 = scmp.ne.s32.totalorder %s140, %s143
      %p149 = scmp.eq.s32.totalorder %s11, 0
      %p150 = por %p148, %p149
      %p151 = scmp.ne.s32.totalorder %s140, %s143
      %p152 = scmp.eq.s32.totalorder %s16, 3
      %p153 = por %p151, %p152
      %p154 = scmp.ne.s32.totalorder %s143, %s144
      %p155 = scmp.eq.s32.totalorder %s16, 0
      %p156 = por %p154, %p155
      %p157 = scmp.ne.s32.totalorder %s143, %s144
      %p158 = scmp.eq.s32.totalorder %s17, 3
      %p159 = por %p157, %p158
      %p161 = scmp.ne.s32.totalorder %s144, %s160
      %p162 = scmp.eq.s32.totalorder %s17, 0
      %p163 = por %p161, %p162
      %p164 = scmp.le.s32.totalorder 1, %s11
      %p165 = scmp.lt.s32.totalorder %s11, 5
      %p166 = pnand %p164, %p165
      %p167 = pneg %p166
      // Predicated region
      $region9: #{basic_conv3d.2} parent=5 // pred_check
        _
      $region10: #{basic_conv3d.2} parent=5 // pred_check_branch
        %169 = sbr.rel (%p166) target = $region12
      $region11: #{basic_conv3d.2} parent=5 // pred_region
        %s170 = ssub.s32 %s11, 1
        // Predicated region
        $region13: #{basic_conv3d.2} parent=11 // pred_check
          %p171 = pneg %p72
        $region14: #{basic_conv3d.2} parent=11 // pred_check_branch
          %173 = sbr.rel (%p171) target = $region16
        $region15: #{basic_conv3d.2} parent=11 // pred_region
          _
        $region16: #{basic_conv3d.2} parent=11 // pred_fallthru
          _
      $region12: #{basic_conv3d.2} parent=5 // pred_fallthru
        _
      %p174 = scmp.lt.s32.totalorder %s11, 4
      // Predicated region
      $region17: #{basic_conv3d.2} parent=5 // pred_check
        %p175 = pneg %p174
      $region18: #{basic_conv3d.2} parent=5 // pred_check_branch
        %177 = sbr.rel (%p175) target = $region20
      $region19: #{basic_conv3d.2} parent=5 // pred_region
        // Predicated region
        $region21: #{basic_conv3d.2} parent=19 // pred_check
          %p178 = pneg %p45
        $region22: #{basic_conv3d.2} parent=19 // pred_check_branch
          %180 = sbr.rel (%p178) target = $region24
        $region23: #{basic_conv3d.2} parent=19 // pred_region
          %s181 = sand.u32 %s35, 1
          %s182 = sand.u32 %s35, 1
          %s183 = smul.addr %s182, 256
          %s184 = scalar_lea.vmem [#allocation2], %s183
          %s185 = smul.u32 4, %s19
          %s186 = smul.addr %s18, 128
          %s187 = sadd.s32 %s185, %s186
          %s188 = smul.addr %s187, 4
          %s189 = scalar_lea.vmem %s0, %s188
          // Predicated region
          $region25: #{basic_conv3d.2} parent=23 // pred_check
            _
          $region26: #{basic_conv3d.2} parent=23 // pred_check_branch
            %191 = sbr.rel (0) target = $region28
          $region27: #{basic_conv3d.2} parent=23 // pred_region
            // Predicated region
            $region29: #{basic_conv3d.2} parent=27 // pred_check
              _
            $region30: #{basic_conv3d.2} parent=27 // pred_check_branch
              %193 = sbr.rel (0) target = $region32
            $region31: #{basic_conv3d.2} parent=27 // pred_region
              loop: start=0, step=1, limit=1
              $region33: #{basic_conv3d.2} parent=31 // loop_pre_header
                _
              $region34: #{basic_conv3d.2} parent=31 // loop_header
                %s195 = sphi 0, %s199
                %p196 = scmp.ge.s32.totalorder %s195, 1
                %s200 = sphi %s189, %s189
                %s201 = sphi %s184, %s184
              $region35: #{basic_conv3d.2} parent=31 // loop_header_branch
                %198 = sbr.rel (%p196) target = $region39
              $region36: #{basic_conv3d.2} parent=31 // loop_body
                %v202 = vld [vmem:[%s200] sm:$0xff]
                %203 = vst [vmem:[%s201] sm:$0xff] %v202
                %v204 = vld [vmem:[%s200 + $0x8] sm:$0xff]
                %205 = vst [vmem:[%s201 + $0x8] sm:$0xff] %v204
                %v206 = vld [vmem:[%s200 + $0x20] sm:$0xff]
                %207 = vst [vmem:[%s201 + $0x10] sm:$0xff] %v206
                %v208 = vld [vmem:[%s200 + $0x28] sm:$0xff]
                %209 = vst [vmem:[%s201 + $0x18] sm:$0xff] %v208
                %v210 = vld [vmem:[%s200 + $0x40] sm:$0xff]
                %211 = vst [vmem:[%s201 + $0x20] sm:$0xff] %v210
                %v212 = vld [vmem:[%s200 + $0x48] sm:$0xff]
                %213 = vst [vmem:[%s201 + $0x28] sm:$0xff] %v212
                %v214 = vld [vmem:[%s200 + $0x60] sm:$0xff]
                %215 = vst [vmem:[%s201 + $0x30] sm:$0xff] %v214
                %v216 = vld [vmem:[%s200 + $0x68] sm:$0xff]
                %217 = vst [vmem:[%s201 + $0x38] sm:$0xff] %v216
                %v218 = vld [vmem:[%s200 + $0x80] sm:$0xff]
                %219 = vst [vmem:[%s201 + $0x40] sm:$0xff] %v218
                %v220 = vld [vmem:[%s200 + $0x88] sm:$0xff]
                %221 = vst [vmem:[%s201 + $0x48] sm:$0xff] %v220
                %v222 = vld [vmem:[%s200 + $0xa0] sm:$0xff]
                %223 = vst [vmem:[%s201 + $0x50] sm:$0xff] %v222
                %v224 = vld [vmem:[%s200 + $0xa8] sm:$0xff]
                %225 = vst [vmem:[%s201 + $0x58] sm:$0xff] %v224
                %v226 = vld [vmem:[%s200 + $0xc0] sm:$0xff]
                %227 = vst [vmem:[%s201 + $0x60] sm:$0xff] %v226
                %v228 = vld [vmem:[%s200 + $0xc8] sm:$0xff]
                %229 = vst [vmem:[%s201 + $0x68] sm:$0xff] %v228
                %v230 = vld [vmem:[%s200 + $0xe0] sm:$0xff]
                %231 = vst [vmem:[%s201 + $0x70] sm:$0xff] %v230
                %v232 = vld [vmem:[%s200 + $0xe8] sm:$0xff]
                %233 = vst [vmem:[%s201 + $0x78] sm:$0xff] %v232
                %v234 = vld [vmem:[%s200 + $0x100] sm:$0xff]
                %235 = vst [vmem:[%s201 + $0x80] sm:$0xff] %v234
                %v236 = vld [vmem:[%s200 + $0x108] sm:$0xff]
                %237 = vst [vmem:[%s201 + $0x88] sm:$0xff] %v236
                %v238 = vld [vmem:[%s200 + $0x120] sm:$0xff]
                %239 = vst [vmem:[%s201 + $0x90] sm:$0xff] %v238
                %v240 = vld [vmem:[%s200 + $0x128] sm:$0xff]
                %241 = vst [vmem:[%s201 + $0x98] sm:$0xff] %v240
                %v242 = vld [vmem:[%s200 + $0x140] sm:$0xff]
                %243 = vst [vmem:[%s201 + $0xa0] sm:$0xff] %v242
                %v244 = vld [vmem:[%s200 + $0x148] sm:$0xff]
                %245 = vst [vmem:[%s201 + $0xa8] sm:$0xff] %v244
                %v246 = vld [vmem:[%s200 + $0x160] sm:$0xff]
                %247 = vst [vmem:[%s201 + $0xb0] sm:$0xff] %v246
                %v248 = vld [vmem:[%s200 + $0x168] sm:$0xff]
                %249 = vst [vmem:[%s201 + $0xb8] sm:$0xff] %v248
                %v250 = vld [vmem:[%s200 + $0x180] sm:$0xff]
                %251 = vst [vmem:[%s201 + $0xc0] sm:$0xff] %v250
                %v252 = vld [vmem:[%s200 + $0x188] sm:$0xff]
                %253 = vst [vmem:[%s201 + $0xc8] sm:$0xff] %v252
                %v254 = vld [vmem:[%s200 + $0x1a0] sm:$0xff]
                %255 = vst [vmem:[%s201 + $0xd0] sm:$0xff] %v254
                %v256 = vld [vmem:[%s200 + $0x1a8] sm:$0xff]
                %257 = vst [vmem:[%s201 + $0xd8] sm:$0xff] %v256
                %v258 = vld [vmem:[%s200 + $0x1c0] sm:$0xff]
                %259 = vst [vmem:[%s201 + $0xe0] sm:$0xff] %v258
                %v260 = vld [vmem:[%s200 + $0x1c8] sm:$0xff]
                %261 = vst [vmem:[%s201 + $0xe8] sm:$0xff] %v260
                %v262 = vld [vmem:[%s200 + $0x1e0] sm:$0xff]
                %263 = vst [vmem:[%s201 + $0xf0] sm:$0xff] %v262
                %v264 = vld [vmem:[%s200 + $0x1e8] sm:$0xff]
                %265 = vst [vmem:[%s201 + $0xf8] sm:$0xff] %v264
              $region37: #{basic_conv3d.2} parent=31 // loop_footer
                %s199 = sadd.s32 1, %s195
              $region38: #{basic_conv3d.2} parent=31 // loop_footer_branch
                %194 = sbr.rel target = $region34
              $region39: #{basic_conv3d.2} parent=31 // loop_exit
                _
            $region32: #{basic_conv3d.2} parent=27 // pred_fallthru
              _
            // Predicated region
            $region40: #{basic_conv3d.2} parent=27 // pred_check
              _
            $region41: #{basic_conv3d.2} parent=27 // pred_check_branch
              %267 = sbr.rel target = $region43
            $region42: #{basic_conv3d.2} parent=27 // pred_region
              _
            $region43: #{basic_conv3d.2} parent=27 // pred_fallthru
              _
          $region28: #{basic_conv3d.2} parent=23 // pred_fallthru
            _
          %268 = vnop
        $region24: #{basic_conv3d.2} parent=19 // pred_fallthru
          _
      $region20: #{basic_conv3d.2} parent=5 // pred_fallthru
        _
      %p269 = scmp.le.s32.totalorder 1, %s11
      %p270 = scmp.lt.s32.totalorder %s11, 5
      %p271 = pnand %p269, %p270
      %p272 = pneg %p271
      // Predicated region
      $region44: #{basic_conv3d.2} parent=5 // pred_check
        _
      $region45: #{basic_conv3d.2} parent=5 // pred_check_branch
        %274 = sbr.rel (%p271) target = $region47
      $region46: #{basic_conv3d.2} parent=5 // pred_region
        %s275 = ssub.s32 %s11, 1
        %s276 = sand.u32 %s38, 1
        %s277 = sand.u32 %s38, 1
        %s278 = smul.addr %s277, 256
        %s279 = scalar_lea.vmem [#allocation2], %s278
        // Predicated region
        $region48: #{basic_conv3d.2} parent=46 // pred_check
          %p280 = pneg %p51
        $region49: #{basic_conv3d.2} parent=46 // pred_check_branch
          %282 = sbr.rel (%p280) target = $region51
        $region50: #{basic_conv3d.2} parent=46 // pred_region
          _
        $region51: #{basic_conv3d.2} parent=46 // pred_fallthru
          _
        %s283 = sand.u32 %s38, 1
        %s284 = sand.u32 %s38, 1
        %s285 = smul.addr %s284, 256
        %s286 = scalar_lea.vmem [#allocation2], %s285
        %p287 = pneg %p51
        %p288 = pneg %p48
        %p289 = pneg %p72
        %p290 = pneg %p69
        %p291 = pneg %p100
        %p292 = pneg %p97
        %s293 = smul.u32 4, %s21
        %p294 = scmp.lt.s32.totalorder %s20, 1
        %s295 = scalar_select %p294, %s20, 1
        %p296 = scmp.lt.s32.totalorder %s293, 7
        %s297 = scalar_select %p296, %s293, 7
        %s298 = smul.addr %s295, 8
        %s299 = sadd.s32 %s297, %s298
        %s300 = smul.addr %s299, 8
        %s301 = scalar_lea.vmem %s2, %s300
        %p302 = pneg %p128
        %p303 = pneg %p125
        %p304 = scmp.lt.s32.totalorder %s20, 1
        %s305 = scalar_select %p304, %s20, 1
        %p306 = scmp.lt.s32.totalorder %s21, 1
        %s307 = scalar_select %p306, %s21, 1
        %s308 = smul.addr %s305, 2
        %s309 = sadd.s32 %s307, %s308
        %s310 = smul.addr %s309, 8
        %s311 = scalar_lea.vmem %s3, %s310
        %p312 = pneg %p156
        %p313 = pneg %p153
        %p314 = scmp.lt.s32.totalorder %s20, 1
        %s315 = scalar_select %p314, %s20, 1
        %p316 = scmp.lt.s32.totalorder %s21, 1
        %s317 = scalar_select %p316, %s21, 1
        %s318 = smul.addr %s315, 2
        %s319 = sadd.s32 %s317, %s318
        %s320 = smul.addr %s319, 8
        %s321 = scalar_lea.vmem %s4, %s320
        %s322 = smul.u32 4, %s21
        %s323 = smul.u32 4, %s21
        %p324 = scmp.lt.s32.totalorder %s20, 1
        %s325 = scalar_select %p324, %s20, 1
        %p326 = scmp.lt.s32.totalorder %s323, 7
        %s327 = scalar_select %p326, %s323, 7
        %s328 = smul.addr %s325, 8
        %s329 = sadd.s32 %s327, %s328
        %s330 = smul.addr %s329, 8
        %s331 = scalar_lea.vmem %s2, %s330
        %s332 = smul.u32 4, %s21
        %p333 = scmp.lt.s32.totalorder %s20, 1
        %s334 = scalar_select %p333, %s20, 1
        %p335 = scmp.lt.s32.totalorder %s21, 1
        %s336 = scalar_select %p335, %s21, 1
        %s337 = smul.addr %s334, 2
        %s338 = sadd.s32 %s336, %s337
        %s339 = smul.addr %s338, 8
        %s340 = scalar_lea.vmem %s3, %s339
        %p341 = scmp.lt.s32.totalorder %s20, 1
        %s342 = scalar_select %p341, %s20, 1
        %p343 = scmp.lt.s32.totalorder %s21, 1
        %s344 = scalar_select %p343, %s21, 1
        %s345 = smul.addr %s342, 2
        %s346 = sadd.s32 %s344, %s345
        %s347 = smul.addr %s346, 8
        %s348 = scalar_lea.vmem %s4, %s347
        %v350 = vld [vmem:[%s1] sm:$0xf]
        %v351 = vld [vmem:[%s279] sm:$0xff]
        %v352 = vld [vmem:[%s279 + $0x8] sm:$0xff]
        %v353 = vld [vmem:[%s279 + $0x10] sm:$0xff]
        %v354 = vld [vmem:[%s279 + $0x18] sm:$0xff]
        %v355 = vld [vmem:[%s279 + $0x20] sm:$0xff]
        %v356 = vld [vmem:[%s279 + $0x28] sm:$0xff]
        %v357 = vld [vmem:[%s279 + $0x30] sm:$0xff]
        %v358 = vld [vmem:[%s279 + $0x38] sm:$0xff]
        %v359 = vld [vmem:[%s279 + $0x40] sm:$0xff]
        %v360 = vld [vmem:[%s279 + $0x48] sm:$0xff]
        %v361 = vld [vmem:[%s279 + $0x50] sm:$0xff]
        %v362 = vld [vmem:[%s279 + $0x58] sm:$0xff]
        %v363 = vld [vmem:[%s279 + $0x60] sm:$0xff]
        %v364 = vld [vmem:[%s279 + $0x68] sm:$0xff]
        %v365 = vld [vmem:[%s279 + $0x70] sm:$0xff]
        %v366 = vld [vmem:[%s279 + $0x78] sm:$0xff]
        %v367 = vld [vmem:[%s279 + $0x80] sm:$0xff]
        %v368 = vld [vmem:[%s279 + $0x88] sm:$0xff]
        %v369 = vld [vmem:[%s279 + $0x90] sm:$0xff]
        %v370 = vld [vmem:[%s279 + $0x98] sm:$0xff]
        %v371 = vld [vmem:[%s279 + $0xa0] sm:$0xff]
        %v372 = vld [vmem:[%s279 + $0xa8] sm:$0xff]
        %v373 = vld [vmem:[%s279 + $0xb0] sm:$0xff]
        %v374 = vld [vmem:[%s279 + $0xb8] sm:$0xff]
        %v375 = vld [vmem:[%s279 + $0xc0] sm:$0xff]
        %v376 = vld [vmem:[%s279 + $0xc8] sm:$0xff]
        %v377 = vld [vmem:[%s279 + $0xd0] sm:$0xff]
        %v378 = vld [vmem:[%s279 + $0xd8] sm:$0xff]
        %v379 = vld [vmem:[%s279 + $0xe0] sm:$0xff]
        %v380 = vld [vmem:[%s279 + $0xe8] sm:$0xff]
        %v381 = vld [vmem:[%s279 + $0xf0] sm:$0xff]
        %v382 = vld [vmem:[%s279 + $0xf8] sm:$0xff]
        %v415 = vunpack.c.l.b16 %v351
        %v416 = vunpack.c.h.b16 %v351
        %v417 = vunpack.c.l.b16 %v352
        %v418 = vunpack.c.h.b16 %v352
        %v419 = vunpack.c.l.b16 %v353
        %v420 = vunpack.c.h.b16 %v353
        %v421 = vunpack.c.l.b16 %v354
        %v422 = vunpack.c.h.b16 %v354
        %v423 = vunpack.c.l.b16 %v355
        %v424 = vunpack.c.h.b16 %v355
        %v425 = vunpack.c.l.b16 %v356
        %v426 = vunpack.c.h.b16 %v356
        %v427 = vunpack.c.l.b16 %v357
        %v428 = vunpack.c.h.b16 %v357
        %v429 = vunpack.c.l.b16 %v358
        %v430 = vunpack.c.h.b16 %v358
        %v431 = vunpack.c.l.b16 %v359
        %v432 = vunpack.c.h.b16 %v359
        %v433 = vunpack.c.l.b16 %v360
        %v434 = vunpack.c.h.b16 %v360
        %v435 = vunpack.c.l.b16 %v361
        %v436 = vunpack.c.h.b16 %v361
        %v437 = vunpack.c.l.b16 %v362
        %v438 = vunpack.c.h.b16 %v362
        %v439 = vunpack.c.l.b16 %v363
        %v440 = vunpack.c.h.b16 %v363
        %v441 = vunpack.c.l.b16 %v364
        %v442 = vunpack.c.h.b16 %v364
        %v443 = vunpack.c.l.b16 %v365
        %v444 = vunpack.c.h.b16 %v365
        %v445 = vunpack.c.l.b16 %v366
        %v446 = vunpack.c.h.b16 %v366
        %v447 = vunpack.c.l.b16 %v367
        %v448 = vunpack.c.h.b16 %v367
        %v449 = vunpack.c.l.b16 %v368
        %v450 = vunpack.c.h.b16 %v368
        %v451 = vunpack.c.l.b16 %v369
        %v452 = vunpack.c.h.b16 %v369
        %v453 = vunpack.c.l.b16 %v370
        %v454 = vunpack.c.h.b16 %v370
        %v455 = vunpack.c.l.b16 %v371
        %v456 = vunpack.c.h.b16 %v371
        %v457 = vunpack.c.l.b16 %v372
        %v458 = vunpack.c.h.b16 %v372
        %v459 = vunpack.c.l.b16 %v373
        %v460 = vunpack.c.h.b16 %v373
        %v461 = vunpack.c.l.b16 %v374
        %v462 = vunpack.c.h.b16 %v374
        %v463 = vunpack.c.l.b16 %v375
        %v464 = vunpack.c.h.b16 %v375
        %v465 = vunpack.c.l.b16 %v376
        %v466 = vunpack.c.h.b16 %v376
        %v467 = vunpack.c.l.b16 %v377
        %v468 = vunpack.c.h.b16 %v377
        %v469 = vunpack.c.l.b16 %v378
        %v470 = vunpack.c.h.b16 %v378
        %v471 = vunpack.c.l.b16 %v379
        %v472 = vunpack.c.h.b16 %v379
        %v473 = vunpack.c.l.b16 %v380
        %v474 = vunpack.c.h.b16 %v380
        %v475 = vunpack.c.l.b16 %v381
        %v476 = vunpack.c.h.b16 %v381
        %v477 = vunpack.c.l.b16 %v382
        %v478 = vunpack.c.h.b16 %v382
        %v479 = vpack.c.b16 %v419, %v415
        %v480 = vpack.c.b16 %v420, %v416
        %v481 = vpack.c.b16 %v421, %v417
        %v482 = vpack.c.b16 %v422, %v418
        %v483 = vpack.c.b16 %v427, %v423
        %v484 = vpack.c.b16 %v428, %v424
        %v485 = vpack.c.b16 %v429, %v425
        %v486 = vpack.c.b16 %v430, %v426
        %v487 = vpack.c.b16 %v435, %v431
        %v488 = vpack.c.b16 %v436, %v432
        %v489 = vpack.c.b16 %v437, %v433
        %v490 = vpack.c.b16 %v438, %v434
        %v491 = vpack.c.b16 %v443, %v439
        %v492 = vpack.c.b16 %v444, %v440
        %v493 = vpack.c.b16 %v445, %v441
        %v494 = vpack.c.b16 %v446, %v442
        %v495 = vpack.c.b16 %v451, %v447
        %v496 = vpack.c.b16 %v452, %v448
        %v497 = vpack.c.b16 %v453, %v449
        %v498 = vpack.c.b16 %v454, %v450
        %v499 = vpack.c.b16 %v459, %v455
        %v500 = vpack.c.b16 %v460, %v456
        %v501 = vpack.c.b16 %v461, %v457
        %v502 = vpack.c.b16 %v462, %v458
        %v503 = vpack.c.b16 %v467, %v463
        %v504 = vpack.c.b16 %v468, %v464
        %v505 = vpack.c.b16 %v469, %v465
        %v506 = vpack.c.b16 %v470, %v466
        %v507 = vpack.c.b16 %v475, %v471
        %v508 = vpack.c.b16 %v476, %v472
        %v509 = vpack.c.b16 %v477, %v473
        %v510 = vpack.c.b16 %v478, %v474
        %543 = vmatprep.subr.bf16.mxu0 %v480
        %544 = vmatpush1.bf16.msra.mxu0 %v479
        %545 = vmatprep.subr.bf16.mxu0 %v484
        %546 = vmatpush1.bf16.msra.mxu0 %v483
        %547 = vmatprep.subr.bf16.mxu0 %v488
        %548 = vmatpush1.bf16.msra.mxu0 %v487
        %549 = vmatprep.subr.bf16.mxu0 %v492
        %550 = vmatpush1.bf16.msra.mxu0 %v491
        %551 = vmatprep.subr.bf16.mxu0 %v496
        %552 = vmatpush1.bf16.msra.mxu0 %v495
        %553 = vmatprep.subr.bf16.mxu0 %v500
        %554 = vmatpush1.bf16.msra.mxu0 %v499
        %555 = vmatprep.subr.bf16.mxu0 %v504
        %556 = vmatpush1.bf16.msra.mxu0 %v503
        %557 = vmatprep.subr.bf16.mxu0 %v508
        %558 = vmatpush1.bf16.msra.mxu0 %v507
        %559 = vmatprep.subr.bf16.mxu0 0
        %560 = vmatpush1.bf16.msra.mxu0 0
        %561 = vmatprep.subr.bf16.mxu0 0
        %562 = vmatpush1.bf16.msra.mxu0 0
        %563 = vmatprep.subr.bf16.mxu0 0
        %564 = vmatpush1.bf16.msra.mxu0 0
        %565 = vmatprep.subr.bf16.mxu0 0
        %566 = vmatpush1.bf16.msra.mxu0 0
        %567 = vmatprep.subr.bf16.mxu0 0
        %568 = vmatpush1.bf16.msra.mxu0 0
        %569 = vmatprep.subr.bf16.mxu0 0
        %570 = vmatpush1.bf16.msra.mxu0 0
        %571 = vmatprep.subr.bf16.mxu0 0
        %572 = vmatpush1.bf16.msra.mxu0 0
        %573 = vmatprep.subr.bf16.mxu0 0
        %574 = vmatpush1.bf16.msra.mxu0 0
        %575 = vmatprep.mubr.bf16.mxu0 0
        %576 = vmatmul.mubr.bf16.gmra.mrb[0].mxu0 %v350
        %v577 = vpop.f32.mrb[0].mxu0
        %v578 = vadd.f32 0.0, %v577
        %v579 = vpop.f32.mrb[0].mxu0
        %v580 = vadd.f32 0.0, %v579
        %v581 = vpop.f32.mrb[0].mxu0
        %v582 = vpop.f32.mrb[0].mxu0
        %583 = vdwg.mxu0
        %584 = vmatprep.subr.bf16.mxu0 %v482
        %585 = vmatpush1.bf16.msra.mxu0 %v481
        %586 = vmatprep.subr.bf16.mxu0 %v486
        %587 = vmatpush1.bf16.msra.mxu0 %v485
        %588 = vmatprep.subr.bf16.mxu0 %v490
        %589 = vmatpush1.bf16.msra.mxu0 %v489
        %590 = vmatprep.subr.bf16.mxu0 %v494
        %591 = vmatpush1.bf16.msra.mxu0 %v493
        %592 = vmatprep.subr.bf16.mxu0 %v498
        %593 = vmatpush1.bf16.msra.mxu0 %v497
        %594 = vmatprep.subr.bf16.mxu0 %v502
        %595 = vmatpush1.bf16.msra.mxu0 %v501
        %596 = vmatprep.subr.bf16.mxu0 %v506
        %597 = vmatpush1.bf16.msra.mxu0 %v505
        %598 = vmatprep.subr.bf16.mxu0 %v510
        %599 = vmatpush1.bf16.msra.mxu0 %v509
        %600 = vmatprep.subr.bf16.mxu0 0
        %601 = vmatpush1.bf16.msra.mxu0 0
        %602 = vmatprep.subr.bf16.mxu0 0
        %603 = vmatpush1.bf16.msra.mxu0 0
        %604 = vmatprep.subr.bf16.mxu0 0
        %605 = vmatpush1.bf16.msra.mxu0 0
        %606 = vmatprep.subr.bf16.mxu0 0
        %607 = vmatpush1.bf16.msra.mxu0 0
        %608 = vmatprep.subr.bf16.mxu0 0
        %609 = vmatpush1.bf16.msra.mxu0 0
        %610 = vmatprep.subr.bf16.mxu0 0
        %611 = vmatpush1.bf16.msra.mxu0 0
        %612 = vmatprep.subr.bf16.mxu0 0
        %613 = vmatpush1.bf16.msra.mxu0 0
        %614 = vmatprep.subr.bf16.mxu0 0
        %615 = vmatpush1.bf16.msra.mxu0 0
        %616 = vmatprep.mubr.bf16.mxu0 0
        %617 = vmatmul.mubr.bf16.gmra.mrb[0].mxu0 %v350
        %v618 = vpop.f32.mrb[0].mxu0
        %v619 = vadd.f32 0.0, %v618
        %v620 = vpop.f32.mrb[0].mxu0
        %v621 = vadd.f32 0.0, %v620
        %v622 = vpop.f32.mrb[0].mxu0
        %v623 = vpop.f32.mrb[0].mxu0
        %624 = vdwg.mxu0
        %625 = vst [vmem:[%s331] sm:$0xff] %v578
        %626 = vst [vmem:[%s331 + $0x8] sm:$0xff] %v580
        %627 = vst [vmem:[%s331 + $0x10] sm:$0xff] %v619
        %628 = vst [vmem:[%s331 + $0x18] sm:$0xff] %v621
        %v629 = vadd.f32 %v578, %v580
        %v630 = vadd.f32 %v629, %v619
        %v631 = vadd.f32 %v630, %v621
        %632 = vadd.xlane.f32.xlu0 %v631
        %v633 = vpop.xlane.xlu0 %632
        %vm634 = vcmask 7168
        %635 = vst.msk [vmem:[%s340] sm:$0xff] %vm634, %v633
        %v636 = vmul.f32 %v578, %v578
        %v637 = vmul.f32 %v580, %v580
        %v638 = vmul.f32 %v619, %v619
        %v639 = vmul.f32 %v621, %v621
        %v640 = vadd.f32 %v636, %v637
        %v641 = vadd.f32 %v640, %v638
        %v642 = vadd.f32 %v641, %v639
        %643 = vadd.xlane.f32.xlu0 %v642
        %v644 = vpop.xlane.xlu0 %643
        %645 = vst.msk [vmem:[%s348] sm:$0xff] %vm634, %v644
        %s646 = smul.u32 4, %s21
        %p647 = scmp.lt.s32.totalorder %s20, 1
        %s648 = scalar_select %p647, %s20, 1
        %p649 = scmp.lt.s32.totalorder %s646, 7
        %s650 = scalar_select %p649, %s646, 7
        %s651 = smul.addr %s648, 8
        %s652 = sadd.s32 %s650, %s651
        %s653 = smul.addr %s652, 8
        %s654 = scalar_lea.vmem %s2, %s653
        %p655 = scmp.lt.s32.totalorder %s20, 1
        %s656 = scalar_select %p655, %s20, 1
        %p657 = scmp.lt.s32.totalorder %s21, 1
        %s658 = scalar_select %p657, %s21, 1
        %s659 = smul.addr %s656, 2
        %s660 = sadd.s32 %s658, %s659
        %s661 = smul.addr %s660, 8
        %s662 = scalar_lea.vmem %s3, %s661
        %p663 = scmp.lt.s32.totalorder %s20, 1
        %s664 = scalar_select %p663, %s20, 1
        %p665 = scmp.lt.s32.totalorder %s21, 1
        %s666 = scalar_select %p665, %s21, 1
        %s667 = smul.addr %s664, 2
        %s668 = sadd.s32 %s666, %s667
        %s669 = smul.addr %s668, 8
        %s670 = scalar_lea.vmem %s4, %s669
        // Predicated region
        $region52: #{basic_conv3d.2} parent=46 // pred_check
          %p671 = pneg %p97
        $region53: #{basic_conv3d.2} parent=46 // pred_check_branch
          %673 = sbr.rel (%p671) target = $region55
        $region54: #{basic_conv3d.2} parent=46 // pred_region
          %s674 = smul.u32 4, %s21
        $region55: #{basic_conv3d.2} parent=46 // pred_fallthru
          _
        // Predicated region
        $region56: #{basic_conv3d.2} parent=46 // pred_check
          %p675 = pneg %p125
        $region57: #{basic_conv3d.2} parent=46 // pred_check_branch
          %677 = sbr.rel (%p675) target = $region59
        $region58: #{basic_conv3d.2} parent=46 // pred_region
          _
        $region59: #{basic_conv3d.2} parent=46 // pred_fallthru
          _
        // Predicated region
        $region60: #{basic_conv3d.2} parent=46 // pred_check
          %p678 = pneg %p153
        $region61: #{basic_conv3d.2} parent=46 // pred_check_branch
          %680 = sbr.rel (%p678) target = $region63
        $region62: #{basic_conv3d.2} parent=46 // pred_region
          _
        $region63: #{basic_conv3d.2} parent=46 // pred_fallthru
          _
      $region47: #{basic_conv3d.2} parent=5 // pred_fallthru
        _
      %p681 = scmp.le.s32.totalorder 2, %s11
      // Predicated region
      $region64: #{basic_conv3d.2} parent=5 // pred_check
        %p682 = pneg %p681
      $region65: #{basic_conv3d.2} parent=5 // pred_check_branch
        %684 = sbr.rel (%p682) target = $region67
      $region66: #{basic_conv3d.2} parent=5 // pred_region
        %s685 = ssub.s32 %s11, 2
        // Predicated region
        $region68: #{basic_conv3d.2} parent=66 // pred_check
          %p686 = pneg %p103
        $region69: #{basic_conv3d.2} parent=66 // pred_check_branch
          %688 = sbr.rel (%p686) target = $region71
        $region70: #{basic_conv3d.2} parent=66 // pred_region
          %s689 = smul.u32 4, %s23
          %p690 = scmp.lt.s32.totalorder %s22, 1
          %s691 = scalar_select %p690, %s22, 1
          %p692 = scmp.lt.s32.totalorder %s689, 7
          %s693 = scalar_select %p692, %s689, 7
          %s694 = smul.addr %s691, 8
          %s695 = sadd.s32 %s693, %s694
          %s696 = smul.addr %s695, 8
          %s697 = scalar_lea.vmem %s2, %s696
        $region71: #{basic_conv3d.2} parent=66 // pred_fallthru
          _
        // Predicated region
        $region72: #{basic_conv3d.2} parent=66 // pred_check
          %p698 = pneg %p131
        $region73: #{basic_conv3d.2} parent=66 // pred_check_branch
          %700 = sbr.rel (%p698) target = $region75
        $region74: #{basic_conv3d.2} parent=66 // pred_region
          %p701 = scmp.lt.s32.totalorder %s22, 1
          %s702 = scalar_select %p701, %s22, 1
          %p703 = scmp.lt.s32.totalorder %s23, 1
          %s704 = scalar_select %p703, %s23, 1
          %s705 = smul.addr %s702, 2
          %s706 = sadd.s32 %s704, %s705
          %s707 = smul.addr %s706, 8
          %s708 = scalar_lea.vmem %s3, %s707
        $region75: #{basic_conv3d.2} parent=66 // pred_fallthru
          _
        // Predicated region
        $region76: #{basic_conv3d.2} parent=66 // pred_check
          %p709 = pneg %p159
        $region77: #{basic_conv3d.2} parent=66 // pred_check_branch
          %711 = sbr.rel (%p709) target = $region79
        $region78: #{basic_conv3d.2} parent=66 // pred_region
          %p712 = scmp.lt.s32.totalorder %s22, 1
          %s713 = scalar_select %p712, %s22, 1
          %p714 = scmp.lt.s32.totalorder %s23, 1
          %s715 = scalar_select %p714, %s23, 1
          %s716 = smul.addr %s713, 2
          %s717 = sadd.s32 %s715, %s716
          %s718 = smul.addr %s717, 8
          %s719 = scalar_lea.vmem %s4, %s718
        $region79: #{basic_conv3d.2} parent=66 // pred_fallthru
          _
      $region67: #{basic_conv3d.2} parent=5 // pred_fallthru
        _
    $region6: #{basic_conv3d.2} parent=1 // loop_footer
      %s15 = sadd.s32 1, %s11
    $region7: #{basic_conv3d.2} parent=1 // loop_footer_branch
      %10 = sbr.rel target = $region3
    $region8: #{basic_conv3d.2} parent=1 // loop_exit
      _

</llo_original>
